<compile_context>
chip_gen: v6e
topology: v6e:2x2x1
jax: 0.10.0
libtpu: 0.0.40
codegen_flags: <defaults>
</compile_context>

<pallas_src>
import jax
import jax.numpy as jnp
from jax.experimental import pallas as pl
from jax.experimental.pallas import tpu as pltpu


def _shakedrop_kernel(scale_ref, x_ref, o_ref):
    # scale_ref: (B,) float32 in SMEM (scalar prefetch)
    # x_ref / o_ref: (r_blk, LANE) VMEM tile for (batch b, row-chunk r)
    b = pl.program_id(0)
    s = scale_ref[b]  # keep scale in f32; multiply upcasts, cast result only
    o_ref[...] = (x_ref[...] * s).astype(o_ref.dtype)


def _divisors(n):
    ds = []
    i = 1
    while i * i <= n:
        if n % i == 0:
            ds.append(i)
            ds.append(n // i)
        i += 1
    return ds


def _pick_lane(F):
    for lane in (1024, 512, 256, 128):
        if F % lane == 0:
            return lane
    return None  # needs pad fallback


def _pick_r_blk(R, LANE, itemsize, B, target_bytes=4 << 20, min_steps=8):
    """Rows per block: ~4 MiB tiles, divides R, multiple of 8, >= min_steps grid steps."""
    max_rows_size = max(1, target_bytes // (LANE * itemsize))
    # chunks-per-batch needed to reach the grid-step floor
    m = min(R, max(1, -(-min_steps // B)))
    max_rows_steps = max(1, -(-R // m))
    max_rows = max(1, min(max_rows_size, max_rows_steps, R))

    # Preferred: divisor of R that is a multiple of 8 and within the cap.
    cands = [d for d in _divisors(R) if d <= max_rows and d % 8 == 0]
    if cands:
        return max(cands)
    # Whole-R block (valid BlockSpec: equals the full array dim).
    if R <= max_rows_size:
        return R
    # Last resort: multiple of 8 within the size cap (partial trailing block,
    # Pallas masks the array boundary correctly).
    return max(8, (max_rows_size // 8) * 8)


def _shakedrop_scale_apply(scale, x):
    """Apply per-batch scalar `scale` (f32, shape (B,)) to x via a Pallas kernel."""
    orig_shape = x.shape
    B = int(orig_shape[0])
    F = 1
    for d in orig_shape[1:]:
        F *= int(d)
    dtype = x.dtype
    itemsize = jnp.dtype(dtype).itemsize

    LANE = _pick_lane(F)
    if LANE is None:
        # TODO(synk): rare F % 128 != 0 case -- pad to a lane-dense layout
        # (costs one extra pad + slice pass; acceptable fallback).
        LANE = 128
        F_pad = ((F + LANE - 1) // LANE) * LANE
        x_flat = jnp.pad(x.reshape(B, F), ((0, 0), (0, F_pad - F)))
        padded = True
    else:
        F_pad = F
        x_flat = x.reshape(B, F)
        padded = False

    R = F_pad // LANE
    x3 = x_flat.reshape(B, R, LANE)

    r_blk = _pick_r_blk(R, LANE, itemsize, B)
    grid = (B, pl.cdiv(R, r_blk))

    grid_spec = pltpu.PrefetchScalarGridSpec(
        num_scalar_prefetch=1,
        grid=grid,
        in_specs=[
            pl.BlockSpec((pl.Squeezed(), r_blk, LANE),
                         lambda b, r, scale_ref: (b, r, 0)),
        ],
        out_specs=pl.BlockSpec((pl.Squeezed(), r_blk, LANE),
                               lambda b, r, scale_ref: (b, r, 0)),
    )

    y3 = pl.pallas_call(
        _shakedrop_kernel,
        out_shape=jax.ShapeDtypeStruct((B, R, LANE), dtype),
        grid_spec=grid_spec,
        compiler_params=pltpu.CompilerParams(
            dimension_semantics=("parallel", "parallel"),
            vmem_limit_bytes=32 * 1024 * 1024,
        ),
    )(scale, x3)

    y_flat = y3.reshape(B, F_pad)
    if padded:
        y_flat = y_flat[:, :F]
    return y_flat.reshape(orig_shape)


def shakedrop(x, key, *, training=True, p_drop=0.5, alpha_range=(-1.0, 1.0)):
    """JAX/Pallas equivalent of ShakeDrop.forward.

    x: (B, C, H, W) array. key: jax PRNG key (used only in training mode).
    """
    B = x.shape[0]
    if training:
        k_gate, k_alpha = jax.random.split(key)
        # gate ~ Bernoulli(1 - p_drop): True -> pass-through, False -> alpha * x
        gate = jax.random.bernoulli(k_gate, p=1.0 - p_drop)
        alpha = jax.random.uniform(
            k_alpha, (B,), dtype=jnp.float32,
            minval=alpha_range[0], maxval=alpha_range[1],
        )
        scale = jnp.where(gate, jnp.ones((B,), jnp.float32), alpha)
    else:
        scale = jnp.full((B,), 1.0 - p_drop, dtype=jnp.float32)
    return _shakedrop_scale_apply(scale, x)


if __name__ == "__main__":
    key = jax.random.PRNGKey(0)
    k_x, k_sd = jax.random.split(key)

    B, C, H, W = 2, 4, 16, 16
    x = jax.random.normal(k_x, (B, C, H, W), dtype=jnp.float32)

    # Training-mode forward (random gate / per-sample alpha).
    y_train = shakedrop(x, k_sd, training=True, p_drop=0.5, alpha_range=(-1.0, 1.0))
    y_train = jax.block_until_ready(y_train)

    # Eval-mode forward: deterministic (1 - p_drop) * x -- verify against reference.
    y_eval = shakedrop(x, k_sd, training=False, p_drop=0.5)
    y_eval = jax.block_until_ready(y_eval)
    ref_eval = 0.5 * x
    assert jnp.allclose(y_eval, ref_eval, atol=1e-6, rtol=1e-6)

    # Verify training-mode against a pure-JAX reference using the same randoms.
    k_gate, k_alpha = jax.random.split(k_sd)
    gate = jax.random.bernoulli(k_gate, p=0.5)
    alpha = jax.random.uniform(k_alpha, (B,), dtype=jnp.float32, minval=-1.0, maxval=1.0)
    scale_ref = jnp.where(gate, jnp.ones((B,), jnp.float32), alpha)
    ref_train = scale_ref[:, None, None, None] * x
    assert jnp.allclose(y_train, ref_train, atol=1e-6, rtol=1e-6)

    print("KERNEL_OK")
</pallas_src>

<mosaic_0001>
module attributes {stable_mosaic.version = 11 : i64} {
  func.func @_shakedrop_kernel(%arg0: i32, %arg1: i32, %arg2: memref<2xf32, #tpu.memory_space<smem>>, %arg3: memref<1x1x1024xf32, #tpu.memory_space<vmem>>, %arg4: memref<1x1x1024xf32, #tpu.memory_space<vmem>>) attributes {dimension_semantics = [#tpu.dimension_semantics<parallel>, #tpu.dimension_semantics<parallel>], iteration_bounds = array<i64: 2, 1>, scalar_prefetch = 1 : i64, scratch_operands = 0 : i64, tpu.core_type = #tpu.core_type<tc>, window_params = [{transform_indices = @transform_0, window_bounds = array<i64: 1, 1, 1024>}, {transform_indices = @transform_1, window_bounds = array<i64: 1, 1, 1024>}]} {
    %0 = arith.index_cast %arg0 : i32 to index
    %1 = memref.load %arg2[%0] : memref<2xf32, #tpu.memory_space<smem>>
    %c0 = arith.constant 0 : index
    %c0_0 = arith.constant 0 : index
    %c0_1 = arith.constant 0 : index
    %2 = vector.load %arg3[%c0, %c0_0, %c0_1] : memref<1x1x1024xf32, #tpu.memory_space<vmem>>, vector<1x1x1024xf32>
    %3 = vector.shape_cast %2 : vector<1x1x1024xf32> to vector<1x1024xf32>
    %4 = vector.broadcast %1 : f32 to vector<1x1024xf32>
    %5 = arith.mulf %3, %4 : vector<1x1024xf32>
    %c0_2 = arith.constant 0 : index
    %c0_3 = arith.constant 0 : index
    %c0_4 = arith.constant 0 : index
    %6 = vector.load %arg4[%c0_2, %c0_3, %c0_4] : memref<1x1x1024xf32, #tpu.memory_space<vmem>>, vector<1x1x1024xf32>
    %7 = vector.shape_cast %6 : vector<1x1x1024xf32> to vector<1x1024xf32>
    %8 = vector.shape_cast %5 : vector<1x1024xf32> to vector<1x1x1024xf32>
    tpu.vector_store %arg4[%c0_2, %c0_3, %c0_4], %8 {strides = array<i32>} : memref<1x1x1024xf32, #tpu.memory_space<vmem>>, vector<1x1x1024xf32>,
    return
  }
  func.func @transform_0(%arg0: i32, %arg1: i32, %arg2: memref<2xf32, #tpu.memory_space<smem>>) -> (i32, i32, i32) {
    %c0_i32 = arith.constant 0 : i32
    %c0_i32_0 = arith.constant 0 : i32
    return %arg0, %arg1, %c0_i32 : i32, i32, i32
  }
  func.func @transform_1(%arg0: i32, %arg1: i32, %arg2: memref<2xf32, #tpu.memory_space<smem>>) -> (i32, i32, i32) {
    %c0_i32 = arith.constant 0 : i32
    %c0_i32_0 = arith.constant 0 : i32
    return %arg0, %arg1, %c0_i32 : i32, i32, i32
  }
}

</mosaic_0001>

<llo_original>
// kernel: tpu_custom_call.1
$region0: #{tpu_custom_call.1}
  #allocation0 [shape = 'u32[]', space=smem, size = 0x4, offset = 0x4, fixed_abs, tag = 'smem constant byte address 0x4 - core index']
  #allocation1 [shape = 'u32[144,128]{1,0:T(1,128)}', space=vmem, size = 0x12000, scoped, tag = 'internal scratch']
  #allocation2 [shape = 's32[1]{0}', space=sflag, size = 0x4, scoped, tag = 'scoped memory for tpu_custom_call.1']
  #allocation3 [shape = 'u8[512]{0}', space=smem, size = 0x200, scoped, tag = 'prefetched SMEM operand 0']
  %s0 = inlined_call_operand.hbm [shape: f32[2], index: 0, kind: input, shape index: {}]
  %s1 = inlined_call_operand.hbm [shape: f32[2,1,1024], index: 1, kind: input, shape index: {}]
  %s2 = inlined_call_operand.hbm [shape: f32[2,1,1024], index: 2, kind: output, shape index: {}]
  %s3 = sld [smem:[#allocation0]]
  $region41: #{tpu_custom_call.1} parent=0
    _
  %s5 = ssub.s32 1, %s3
  %s6 = scalar_select 0, %s5, %s3
  %8 = dma.hbm_to_smem %s0, 16, [#allocation3], [#allocation2]
  %9 = dma.done [#allocation2], 16
  %10 = sfence
  $region1: #{tpu_custom_call.1} parent=0
    #allocation4 [shape = 'u8[8192]{0}', space=vmem, size = 0x2000, scoped, tag = 'input window, operand 1']
    #allocation5 [shape = 's32[2]{0}', space=sflag, size = 0x8, scoped, tag = 'scoped memory for tpu_custom_call.1']
    #allocation6 [shape = 's32[2]{0}', space=sflag, size = 0x8, scoped, tag = 'scoped memory for tpu_custom_call.1']
    #allocation7 [shape = 'u8[8192]{0}', space=vmem, size = 0x2000, scoped, tag = 'output window, operand 0']
    %11 = vsyncpa [#allocation5], 0
    %s12 = scalar_lea.sflag [#allocation5], 1
    %13 = vsyncpa %s12, 0
    %14 = vsyncpa [#allocation6], 0
    %s15 = scalar_lea.sflag [#allocation6], 1
    %16 = vsyncpa %s15, 0
    loop: start=0, step=1, limit=4
    $region2: #{tpu_custom_call.1} parent=1 // loop_pre_header
      _
    $region3: #{tpu_custom_call.1} parent=1 // loop_header
      %s18 = sphi 0, %s22
      %p19 = scmp.ge.s32.totalorder %s18, 4
      %s25 = sphi 0, %s37
      %s26 = sphi 0, %s33
      %s27 = sphi 0, %s25
      %s28 = sphi 0, %s26
      %s29 = sphi 0, %s27
      %s30 = sphi 0, %s28
      %s42 = sphi 0, %s44
      %s45 = sphi 0, %s42
      %s46 = sphi 0, %s45
      %s62 = sphi 0, %s46
      %s70 = sphi 0, %s72
      %s73 = sphi 0, %s70
      %s74 = sphi 0, %s73
      %s90 = sphi 0, %s74
    $region4: #{tpu_custom_call.1} parent=1 // loop_header_branch
      %21 = sbr.rel (%p19) target = $region8
    $region5: #{tpu_custom_call.1} parent=1 // loop_body
      %s23 = ssub.s32 %s18, 1
      %s24 = ssub.s32 %s18, 2
      %s31 = sadd.s32 1, %s26
      %p32 = scmp.ge.s32.totalorder %s31, 1
      %s33 = scalar_select %p32, 0, %s31
      %s34 = sadd.s32 1, %s25
      %s35 = scalar_select %p32, %s34, %s25
      %p36 = scmp.ge.s32.totalorder %s35, 2
      %s37 = scalar_select %p36, 0, %s35
      %s38 = ssub.s32 %s25, %s37
      %s39 = ssub.s32 %s26, %s33
      %s40 = sor.u32 %s38, %s39
      %p41 = scmp.eq.s32.totalorder %s40, 0
      %s43 = sadd.s32 %s42, 1
      %s44 = scalar_select %p41, %s42, %s43
      %p47 = pneg %p41
      %p48 = scmp.eq.s32.totalorder %s18, 1
      %p49 = por %p47, %p48
      %p50 = scmp.ne.s32.totalorder %s42, %s45
      %p51 = scmp.eq.s32.totalorder %s18, 0
      %p52 = por %p50, %p51
      %p53 = scmp.ne.s32.totalorder %s42, %s45
      %p54 = scmp.eq.s32.totalorder %s23, 1
      %p55 = por %p53, %p54
      %p56 = scmp.ne.s32.totalorder %s45, %s46
      %p57 = scmp.eq.s32.totalorder %s23, 0
      %p58 = por %p56, %p57
      %p59 = scmp.ne.s32.totalorder %s45, %s46
      %p60 = scmp.eq.s32.totalorder %s24, 1
      %p61 = por %p59, %p60
      %p63 = scmp.ne.s32.totalorder %s46, %s62
      %p64 = scmp.eq.s32.totalorder %s24, 0
      %p65 = por %p63, %p64
      %s66 = ssub.s32 %s25, %s37
      %s67 = ssub.s32 %s26, %s33
      %s68 = sor.u32 %s66, %s67
      %p69 = scmp.eq.s32.totalorder %s68, 0
      %s71 = sadd.s32 %s70, 1
      %s72 = scalar_select %p69, %s70, %s71
      %p75 = pneg %p69
      %p76 = scmp.eq.s32.totalorder %s18, 1
      %p77 = por %p75, %p76
      %p78 = scmp.ne.s32.totalorder %s70, %s73
      %p79 = scmp.eq.s32.totalorder %s18, 0
      %p80 = por %p78, %p79
      %p81 = scmp.ne.s32.totalorder %s70, %s73
      %p82 = scmp.eq.s32.totalorder %s23, 1
      %p83 = por %p81, %p82
      %p84 = scmp.ne.s32.totalorder %s73, %s74
      %p85 = scmp.eq.s32.totalorder %s23, 0
      %p86 = por %p84, %p85
      %p87 = scmp.ne.s32.totalorder %s73, %s74
      %p88 = scmp.eq.s32.totalorder %s24, 1
      %p89 = por %p87, %p88
      %p91 = scmp.ne.s32.totalorder %s74, %s90
      %p92 = scmp.eq.s32.totalorder %s24, 0
      %p93 = por %p91, %p92
      %p94 = scmp.le.s32.totalorder 1, %s18
      %p95 = scmp.lt.s32.totalorder %s18, 3
      %p96 = pnand %p94, %p95
      %p97 = pneg %p96
      // Predicated region
      $region9: #{tpu_custom_call.1} parent=5 // pred_check
        _
      $region10: #{tpu_custom_call.1} parent=5 // pred_check_branch
        %99 = sbr.rel (%p96) target = $region12
      $region11: #{tpu_custom_call.1} parent=5 // pred_region
        %s100 = ssub.s32 %s18, 1
      $region12: #{tpu_custom_call.1} parent=5 // pred_fallthru
        _
      %p101 = scmp.lt.s32.totalorder %s18, 2
      // Predicated region
      $region13: #{tpu_custom_call.1} parent=5 // pred_check
        %p102 = pneg %p101
      $region14: #{tpu_custom_call.1} parent=5 // pred_check_branch
        %104 = sbr.rel (%p102) target = $region16
      $region15: #{tpu_custom_call.1} parent=5 // pred_region
        // Predicated region
        $region17: #{tpu_custom_call.1} parent=15 // pred_check
          %p105 = pneg %p52
        $region18: #{tpu_custom_call.1} parent=15 // pred_check_branch
          %107 = sbr.rel (%p105) target = $region20
        $region19: #{tpu_custom_call.1} parent=15 // pred_region
          %s108 = sand.u32 %s42, 1
          %s109 = scalar_lea.sflag [#allocation5], %s108
          %s110 = sand.u32 %s42, 1
          %s111 = smul.addr %s110, 8
          %s112 = scalar_lea.vmem [#allocation4], %s111
          %s114 = ssub.s32 128, 128
          %115 = vsyncadd %s109, %s114
          %s116 = smul.addr %s26, 8
          %s117 = smul.addr %s25, 8
          %s118 = sadd.s32 %s116, %s117
          %s119 = smul.addr %s118, 16
          %s120 = scalar_lea.hbm %s1, %s119
          %s122 = sshll.u32 %s112, 4
          %s123 = int_to_ptr.vmem [resolvable:$true] %s122
          %125 = dma.hbm_to_vmem [thread:$0]  %s120, 128, %s123, %s109
        $region20: #{tpu_custom_call.1} parent=15 // pred_fallthru
          _
      $region16: #{tpu_custom_call.1} parent=5 // pred_fallthru
        _
      %p126 = scmp.le.s32.totalorder 1, %s18
      %p127 = scmp.lt.s32.totalorder %s18, 3
      %p128 = pnand %p126, %p127
      %p129 = pneg %p128
      // Predicated region
      $region21: #{tpu_custom_call.1} parent=5 // pred_check
        _
      $region22: #{tpu_custom_call.1} parent=5 // pred_check_branch
        %131 = sbr.rel (%p128) target = $region24
      $region23: #{tpu_custom_call.1} parent=5 // pred_region
        %s132 = ssub.s32 %s18, 1
        %s133 = sand.u32 %s45, 1
        %s134 = scalar_lea.sflag [#allocation5], %s133
        %s135 = sand.u32 %s45, 1
        %s136 = smul.addr %s135, 8
        %s137 = scalar_lea.vmem [#allocation4], %s136
        // Predicated region
        $region25: #{tpu_custom_call.1} parent=23 // pred_check
          %p138 = pneg %p58
        $region26: #{tpu_custom_call.1} parent=23 // pred_check_branch
          %140 = sbr.rel (%p138) target = $region28
        $region27: #{tpu_custom_call.1} parent=23 // pred_region
          %141 = dma.done %s134, 128
        $region28: #{tpu_custom_call.1} parent=23 // pred_fallthru
          _
        %s142 = sand.u32 %s45, 1
        %s143 = scalar_lea.sflag [#allocation5], %s142
        %s144 = sand.u32 %s45, 1
        %s145 = smul.addr %s144, 8
        %s146 = scalar_lea.vmem [#allocation4], %s145
        %p147 = pneg %p58
        %p148 = pneg %p55
        %p149 = pneg %p86
        %p150 = pneg %p83
        %s151 = sand.u32 %s73, 1
        %s152 = scalar_lea.sflag [#allocation6], %s151
        %s153 = sand.u32 %s73, 1
        %s154 = smul.addr %s153, 8
        %s155 = scalar_lea.vmem [#allocation7], %s154
        %s156 = sld [smem:[#allocation3 + %s27]]
        %v157 = vld [vmem:[%s137] sm:$0xff]
        %v158 = vstv %s156
        %v159 = vmul.f32 %v157, %v158
        %160 = vst [vmem:[%s155] sm:$0xff] %v159
        %s161 = sand.u32 %s73, 1
        %s162 = scalar_lea.sflag [#allocation6], %s161
        %s163 = sand.u32 %s73, 1
        %s164 = smul.addr %s163, 8
        %s165 = scalar_lea.vmem [#allocation7], %s164
        // Predicated region
        $region29: #{tpu_custom_call.1} parent=23 // pred_check
          %p166 = pneg %p83
        $region30: #{tpu_custom_call.1} parent=23 // pred_check_branch
          %168 = sbr.rel (%p166) target = $region32
        $region31: #{tpu_custom_call.1} parent=23 // pred_region
          %s170 = ssub.s32 128, 128
          %171 = vsyncadd %s162, %s170
          %s172 = smul.addr %s28, 8
          %s173 = smul.addr %s27, 8
          %s174 = sadd.s32 %s172, %s173
          %s175 = smul.addr %s174, 16
          %s176 = scalar_lea.hbm %s2, %s175
          %s178 = sshll.u32 %s165, 4
          %s179 = int_to_ptr.vmem [resolvable:$true] %s178
          %181 = dma.vmem_to_hbm [thread:$0]  %s179, 128, %s176, %s162
        $region32: #{tpu_custom_call.1} parent=23 // pred_fallthru
          _
      $region24: #{tpu_custom_call.1} parent=5 // pred_fallthru
        _
      %p182 = scmp.le.s32.totalorder 2, %s18
      // Predicated region
      $region33: #{tpu_custom_call.1} parent=5 // pred_check
        %p183 = pneg %p182
      $region34: #{tpu_custom_call.1} parent=5 // pred_check_branch
        %185 = sbr.rel (%p183) target = $region36
      $region35: #{tpu_custom_call.1} parent=5 // pred_region
        %s186 = ssub.s32 %s18, 2
        // Predicated region
        $region37: #{tpu_custom_call.1} parent=35 // pred_check
          %p187 = pneg %p89
        $region38: #{tpu_custom_call.1} parent=35 // pred_check_branch
          %189 = sbr.rel (%p187) target = $region40
        $region39: #{tpu_custom_call.1} parent=35 // pred_region
          %s190 = sand.u32 %s74, 1
          %s191 = scalar_lea.sflag [#allocation6], %s190
          %s192 = sand.u32 %s74, 1
          %s193 = smul.addr %s192, 8
          %s194 = scalar_lea.vmem [#allocation7], %s193
          %195 = dma.done %s191, 128
        $region40: #{tpu_custom_call.1} parent=35 // pred_fallthru
          _
      $region36: #{tpu_custom_call.1} parent=5 // pred_fallthru
        _
    $region6: #{tpu_custom_call.1} parent=1 // loop_footer
      %s22 = sadd.s32 1, %s18
    $region7: #{tpu_custom_call.1} parent=1 // loop_footer_branch
      %17 = sbr.rel target = $region3
    $region8: #{tpu_custom_call.1} parent=1 // loop_exit
      _
    %196 = vsyncpa [#allocation5], 1
    %s197 = scalar_lea.sflag [#allocation5], 1
    %198 = vsyncpa %s197, 1
    %199 = vsyncpa [#allocation6], 1
    %s200 = scalar_lea.sflag [#allocation6], 1
    %201 = vsyncpa %s200, 1

</llo_original>
